<compile_context>
chip_gen: v6e
topology: v6e:2x2x1
jax: 0.10.0
libtpu: 0.0.40
codegen_flags: <defaults>
</compile_context>

<pallas_src>
import jax
import jax.numpy as jnp
from jax.experimental import pallas as pl
from jax.experimental.pallas import tpu as pltpu


_SOFTPLUS_THRESHOLD = 20.0  # matches PyTorch F.softplus default threshold


def _mish_kernel(x_ref, o_ref):
    x = x_ref[...].astype(jnp.float32)
    # Single-exp form:
    #   softplus(x) = log(1 + e^x)
    #   tanh(softplus(x)) = t / (t + 2),  t = e^x * (e^x + 2)
    # Clamp BEFORE exp (e^40 ~ 2.4e17 fits f32, no overflow). Above the
    # softplus threshold PyTorch returns x, and tanh(x>20) == 1 in f32,
    # so y = x on that branch.
    e = jnp.exp(jnp.minimum(x, _SOFTPLUS_THRESHOLD))
    t = e * (e + 2.0)
    y = jnp.where(x > _SOFTPLUS_THRESHOLD, x, x * t / (t + 2.0))
    o_ref[...] = y.astype(o_ref.dtype)


def _choose_layout(n):
    """Pick a lane width W (multiple of 128) for the flat -> (rows, W) view.

    Prefer a wide W that divides n exactly so no host-side pad / post-slice
    copies are needed (the common case for conv feature maps). Returns
    (lane_width, pad_elements)."""
    for w in (2048, 1024, 512, 256, 128):
        if n % w == 0:
            return w, 0
    # Rare ragged case: pad the flat vector only up to the next multiple of W
    # (<= W-1 extra elements, negligible vs. a full-tensor pad).
    w = 512
    n_pad = pl.cdiv(n, w) * w
    return w, n_pad - n


def mish(x, *, target_block_elems=512 * 1024):
    """Elementwise Mish. Any shape; computes in f32, returns x.dtype.

    target_block_elems ~ 512K -> ~2 MiB/block for f32. Input + output each
    double-buffered is ~8 MiB VMEM, inside the scoped-VMEM defaults on
    v5e (16 MiB), v6e (32 MiB) and v7x (32 MiB scoped / 64 MiB physical)."""
    orig_shape = x.shape
    orig_dtype = x.dtype
    n = x.size

    lanes, pad = _choose_layout(n)
    xf = jnp.ravel(x)
    if pad:
        xf = jnp.pad(xf, (0, pad))
    rows = (n + pad) // lanes
    x2d = xf.reshape(rows, lanes)

    # Block rows: a multiple of 8 (or the full row extent), sized for ~MiB DMAs.
    max_block_rows = max(8, (target_block_elems // lanes) // 8 * 8)
    block_rows = rows if rows <= max_block_rows else max_block_rows

    grid = pl.cdiv(rows, block_rows)
    # Give the grid >= 2 steps when possible so v7x's two TensorCores both get
    # work along the "parallel" axis (near-neutral on single-TC v5e/v6e).
    if grid == 1 and rows > 8:
        half = (rows + 1) // 2
        block_rows = min(rows, ((half + 7) // 8) * 8)
        grid = pl.cdiv(rows, block_rows)

    out2d = pl.pallas_call(
        _mish_kernel,
        out_shape=jax.ShapeDtypeStruct((rows, lanes), orig_dtype),
        grid_spec=pltpu.PrefetchScalarGridSpec(
            num_scalar_prefetch=0,
            grid=(grid,),
            in_specs=[pl.BlockSpec((block_rows, lanes), lambda i: (i, 0))],
            out_specs=pl.BlockSpec((block_rows, lanes), lambda i: (i, 0)),
        ),
        compiler_params=pltpu.CompilerParams(
            dimension_semantics=("parallel",)),
    )(x2d)

    if pad:
        return out2d.reshape(-1)[:n].reshape(orig_shape)
    return out2d.reshape(orig_shape)


def _mish_ref(x):
    """Pure-JAX reference matching PyTorch: x * tanh(softplus(x))."""
    xf = x.astype(jnp.float32)
    sp = jnp.where(xf > _SOFTPLUS_THRESHOLD, xf,
                   jnp.log1p(jnp.exp(jnp.minimum(xf, _SOFTPLUS_THRESHOLD))))
    return (xf * jnp.tanh(sp)).astype(x.dtype)


if __name__ == "__main__":
    key = jax.random.PRNGKey(0)

    # Main case: NCHW feature map (divides evenly by the lane width -> no pad).
    k0, k1, k2 = jax.random.split(key, 3)
    x_main = jax.random.normal(k0, (2, 4, 16, 16), dtype=jnp.float32) * 10.0

    # Extra coverage: ragged element count (pad fallback) and a shape that
    # exercises a >1-step grid with a partial last block.
    x_ragged = jax.random.normal(k1, (3, 5, 7, 11), dtype=jnp.float32) * 5.0
    x_multi = jax.random.normal(k2, (9, 128), dtype=jnp.float32) * 5.0

    ok = True
    for x in (x_main, x_ragged, x_multi):
        y = mish(x)
        jax.block_until_ready(y)
        y_ref = _mish_ref(x)
        ok &= (y.shape == x.shape) and (y.dtype == x.dtype)
        ok &= bool(jnp.allclose(y, y_ref, atol=1e-5, rtol=1e-5))

    assert ok
    print("KERNEL_OK")
</pallas_src>

<mosaic_0001>
module attributes {stable_mosaic.version = 11 : i64} {
  func.func @_mish_kernel(%arg0: i32, %arg1: memref<1x2048xf32, #tpu.memory_space<vmem>>, %arg2: memref<1x2048xf32, #tpu.memory_space<vmem>>) attributes {dimension_semantics = [#tpu.dimension_semantics<parallel>], iteration_bounds = array<i64: 1>, scalar_prefetch = 0 : i64, scratch_operands = 0 : i64, tpu.core_type = #tpu.core_type<tc>, window_params = [{transform_indices = @transform_0, window_bounds = array<i64: 1, 2048>}, {transform_indices = @transform_1, window_bounds = array<i64: 1, 2048>}]} {
    %c0 = arith.constant 0 : index
    %c0_0 = arith.constant 0 : index
    %0 = vector.load %arg1[%c0, %c0_0] : memref<1x2048xf32, #tpu.memory_space<vmem>>, vector<1x2048xf32>
    %cst = arith.constant 2.000000e+01 : f32
    %1 = vector.broadcast %cst : f32 to vector<1x2048xf32>
    %2 = arith.minimumf %0, %1 : vector<1x2048xf32>
    %3 = math.exp %2 : vector<1x2048xf32>
    %cst_1 = arith.constant 2.000000e+00 : f32
    %4 = vector.broadcast %cst_1 : f32 to vector<1x2048xf32>
    %5 = arith.addf %3, %4 : vector<1x2048xf32>
    %6 = arith.mulf %3, %5 : vector<1x2048xf32>
    %cst_2 = arith.constant 2.000000e+01 : f32
    %7 = vector.broadcast %cst_2 : f32 to vector<1x2048xf32>
    %8 = arith.cmpf ogt, %0, %7 : vector<1x2048xf32>
    %9 = arith.mulf %0, %6 : vector<1x2048xf32>
    %cst_3 = arith.constant 2.000000e+00 : f32
    %10 = vector.broadcast %cst_3 : f32 to vector<1x2048xf32>
    %11 = arith.addf %6, %10 : vector<1x2048xf32>
    %12 = arith.divf %9, %11 : vector<1x2048xf32>
    %13 = arith.select %8, %0, %12 : vector<1x2048xi1>, vector<1x2048xf32>
    %c0_4 = arith.constant 0 : index
    %c0_5 = arith.constant 0 : index
    %14 = vector.load %arg2[%c0_4, %c0_5] : memref<1x2048xf32, #tpu.memory_space<vmem>>, vector<1x2048xf32>
    tpu.vector_store %arg2[%c0_4, %c0_5], %13 {strides = array<i32>} : memref<1x2048xf32, #tpu.memory_space<vmem>>, vector<1x2048xf32>,
    return
  }
  func.func @transform_0(%arg0: i32) -> (i32, i32) {
    %c0_i32 = arith.constant 0 : i32
    %c0_i32_0 = arith.constant 0 : i32
    return %arg0, %c0_i32 : i32, i32
  }
  func.func @transform_1(%arg0: i32) -> (i32, i32) {
    %c0_i32 = arith.constant 0 : i32
    %c0_i32_0 = arith.constant 0 : i32
    return %arg0, %c0_i32 : i32, i32
  }
}

</mosaic_0001>

<llo_original>
// kernel: tpu_custom_call.1
$region0: #{tpu_custom_call.1}
  #allocation0 [shape = 'u32[]', space=smem, size = 0x4, offset = 0x4, fixed_abs, tag = 'smem constant byte address 0x4 - core index']
  #allocation1 [shape = 'u32[144,128]{1,0:T(1,128)}', space=vmem, size = 0x12000, scoped, tag = 'internal scratch']
  %s0 = inlined_call_operand.hbm [shape: f32[1,2048], index: 0, kind: input, shape index: {}]
  %s1 = inlined_call_operand.hbm [shape: f32[1,2048], index: 1, kind: output, shape index: {}]
  %s2 = sld [smem:[#allocation0]]
  $region18: #{tpu_custom_call.1} parent=0
    _
  %s4 = ssub.s32 1, %s2
  %s5 = scalar_select 0, %s4, %s2
  $region1: #{tpu_custom_call.1} parent=0
    #allocation2 [shape = 'u8[8192]{0}', space=vmem, size = 0x2000, scoped, tag = 'input window, operand 0, single buffered']
    #allocation3 [shape = 's32[1]{0}', space=sflag, size = 0x4, scoped, tag = 'scoped memory for tpu_custom_call.1']
    #allocation4 [shape = 's32[1]{0}', space=sflag, size = 0x4, scoped, tag = 'scoped memory for tpu_custom_call.1']
    #allocation5 [shape = 'u8[8192]{0}', space=vmem, size = 0x2000, scoped, tag = 'output window, operand 0, single buffered']
    %6 = vsyncpa [#allocation3], 0
    %7 = vsyncpa [#allocation4], 0
    // Predicated region
    $region2: #{tpu_custom_call.1} parent=1 // pred_check
      _
    $region3: #{tpu_custom_call.1} parent=1 // pred_check_branch
      %9 = sbr.rel (0) target = $region5
    $region4: #{tpu_custom_call.1} parent=1 // pred_region
      %s11 = ssub.s32 256, 256
      %12 = vsyncadd [#allocation3], %s11
      %s14 = sshll.u32 [#allocation2], 4
      %s15 = int_to_ptr.vmem [resolvable:$true] %s14
      %17 = dma.hbm_to_vmem [thread:$0]  %s0, 256, %s15, [#allocation3]
    $region5: #{tpu_custom_call.1} parent=1 // pred_fallthru
      _
    // Predicated region
    $region6: #{tpu_custom_call.1} parent=1 // pred_check
      _
    $region7: #{tpu_custom_call.1} parent=1 // pred_check_branch
      %19 = sbr.rel (0) target = $region9
    $region8: #{tpu_custom_call.1} parent=1 // pred_region
      %20 = dma.done [#allocation3], 256
    $region9: #{tpu_custom_call.1} parent=1 // pred_fallthru
      _
    %v21 = vld [vmem:[#allocation2] sm:$0xff]
    %v22 = vld [vmem:[#allocation2 + $0x8] sm:$0xff]
    %v23 = vmin.f32 %v21, 20.0
    %v24 = vmin.f32 %v22, 20.0
    %v25 = vmul.f32 %v23, 1.442695
    %v26 = vpow.pop %v25
    %v27 = vmul.f32 %v24, 1.442695
    %v28 = vpow.pop %v27
    %v29 = vadd.f32 %v26, 2.0
    %v30 = vadd.f32 %v28, 2.0
    %v31 = vmul.f32 %v26, %v29
    %v32 = vmul.f32 %v28, %v30
    %vm33 = vcmp.gt.f32.partialorder %v21, 20.0
    %vm34 = vcmp.gt.f32.partialorder %v22, 20.0
    %v35 = vmul.f32 %v21, %v31
    %v36 = vmul.f32 %v22, %v32
    %v37 = vadd.f32 %v31, 2.0
    %v38 = vadd.f32 %v32, 2.0
    %v39 = vrcp.pop %v37
    %v40 = vmul.f32 %v35, %v39
    %v41 = vrcp.pop %v38
    %v42 = vmul.f32 %v36, %v41
    %v43 = vsel %vm33, %v21, %v40
    %v44 = vsel %vm34, %v22, %v42
    %45 = vst [vmem:[#allocation5] sm:$0xff] %v43
    %46 = vst [vmem:[#allocation5 + $0x8] sm:$0xff] %v44
    // Predicated region
    $region10: #{tpu_custom_call.1} parent=1 // pred_check
      _
    $region11: #{tpu_custom_call.1} parent=1 // pred_check_branch
      %48 = sbr.rel (0) target = $region13
    $region12: #{tpu_custom_call.1} parent=1 // pred_region
      %s50 = ssub.s32 256, 256
      %51 = vsyncadd [#allocation4], %s50
      %s53 = sshll.u32 [#allocation5], 4
      %s54 = int_to_ptr.vmem [resolvable:$true] %s53
      %56 = dma.vmem_to_hbm [thread:$0]  %s54, 256, %s1, [#allocation4]
    $region13: #{tpu_custom_call.1} parent=1 // pred_fallthru
      _
    // Predicated region
    $region14: #{tpu_custom_call.1} parent=1 // pred_check
      _
    $region15: #{tpu_custom_call.1} parent=1 // pred_check_branch
      %58 = sbr.rel (0) target = $region17
    $region16: #{tpu_custom_call.1} parent=1 // pred_region
      %59 = dma.done [#allocation4], 256
    $region17: #{tpu_custom_call.1} parent=1 // pred_fallthru
      _
    %60 = vsyncpa [#allocation3], 1
    %61 = vsyncpa [#allocation4], 1

</llo_original>
